<compile_context>
chip_gen: v6e
topology: v6e:2x2x1
jax: 0.10.0
libtpu: 0.0.40
codegen_flags: <defaults>
</compile_context>

<pallas_src>
import functools
import math

import jax
import jax.numpy as jnp
from jax.experimental import pallas as pl
from jax.experimental.pallas import tpu as pltpu


def _self_attention_kernel(x_ref, mask_ref, wq_ref, bq_ref, wkv_ref, bkv_ref,
                           wo_ref, bo_ref, lnw_ref, lnb_ref, o_ref, ctx_ref,
                           *, num_heads, head_dim, q_tile, eps):
    S, H = x_ref.shape
    tq = q_tile

    x_all = x_ref[...]                                   # (S, H) full sequence (K/V side)
    if tq == S:
        x_q = x_all                                      # single query tile
    else:
        row0 = pl.multiple_of(pl.program_id(1) * tq, tq)
        x_q = x_ref[pl.ds(row0, tq), :]                  # (tq, H) query rows for this step
    x_q_f32 = x_q.astype(jnp.float32)                    # residual / LayerNorm path (f32)

    # bf16 MXU operands, f32 accumulation.
    x_q_bf = x_q.astype(jnp.bfloat16)
    x_all_bf = x_all.astype(jnp.bfloat16)

    scale = 1.0 / math.sqrt(head_dim)
    q = jnp.dot(x_q_bf, wq_ref[...], preferred_element_type=jnp.float32)
    q = (q + bq_ref[...].astype(jnp.float32)) * scale    # (tq, H) f32, pre-scaled by 1/sqrt(d)
    kv = jnp.dot(x_all_bf, wkv_ref[...], preferred_element_type=jnp.float32)
    kv = kv + bkv_ref[...].astype(jnp.float32)           # (S, 2H) f32: [K | V]

    mask = mask_ref[...].astype(jnp.float32)             # (tq, S) additive mask, f32

    for h in range(num_heads):                           # static loop (small head counts)
        lo = h * head_dim
        hi = lo + head_dim
        q_h = q[:, lo:hi].astype(jnp.bfloat16)           # (tq, d)
        k_h = kv[:, lo:hi].astype(jnp.bfloat16)          # (S, d)
        v_h = kv[:, H + lo:H + hi].astype(jnp.bfloat16)  # (S, d)

        # QK^T with no explicit transpose: contract the last dim of both operands.
        scores = jax.lax.dot_general(
            q_h, k_h, (((1,), (1,)), ((), ())),
            preferred_element_type=jnp.float32) + mask   # (tq, S) f32

        m = jnp.max(scores, axis=-1, keepdims=True)
        p = jnp.exp(scores - m)
        inv = pl.reciprocal(jnp.sum(p, axis=-1, keepdims=True), approx=True)  # EUP slot

        ctx = jnp.dot(p.astype(jnp.bfloat16), v_h,
                      preferred_element_type=jnp.float32)                      # (tq, d) f32
        ctx_ref[:, lo:hi] = (ctx * inv).astype(ctx_ref.dtype)                  # VMEM scratch

    # Single full-depth output projection from the VMEM ctx scratch.
    hs = jnp.dot(ctx_ref[...], wo_ref[...], preferred_element_type=jnp.float32)
    y = hs + bo_ref[...].astype(jnp.float32) + x_q_f32

    # TF-style LayerNorm (epsilon inside the square root).
    u = jnp.mean(y, axis=-1, keepdims=True)
    yc = y - u
    var = jnp.mean(yc * yc, axis=-1, keepdims=True)
    inv_std = jax.lax.rsqrt(var + eps)
    out = lnw_ref[...].astype(jnp.float32) * (yc * inv_std) + lnb_ref[...].astype(jnp.float32)
    o_ref[...] = out.astype(o_ref.dtype)


def self_attention(x, attention_mask, params, *, num_heads, eps=1e-12, q_tile=256):
    """x: (B, S, H); attention_mask: additive mask of shape (S, S), (1, 1, S, S),
    (B, 1, S, S) or (B, S, S) (0 where attending, -10000 elsewhere; head-invariant).
    params: (in, out)-layout weights wq, wk, wv, wo (H,H); bq, bk, bv, bo (H,);
            ln_w, ln_b (H,).
    """
    B, S, H = x.shape
    assert H % num_heads == 0
    head_dim = H // num_heads

    # Query tile: a multiple of 8 (sublane) that divides S, else the full sequence.
    tq = min(q_tile, S)
    if S % tq != 0 or (tq % 8 != 0 and tq != S):
        tq = S
    n_q = S // tq

    f32, bf16 = jnp.float32, jnp.bfloat16
    wq = params["wq"].astype(bf16)                                             # (H, H)
    wkv = jnp.concatenate([params["wk"], params["wv"]], axis=1).astype(bf16)   # (H, 2H)
    wo = params["wo"].astype(bf16)                                             # (H, H)
    bq = params["bq"].reshape(1, H).astype(f32)
    bkv = jnp.concatenate([params["bk"], params["bv"]]).reshape(1, 2 * H).astype(f32)
    bo = params["bo"].reshape(1, H).astype(f32)
    lnw = params["ln_w"].reshape(1, H).astype(f32)
    lnb = params["ln_b"].reshape(1, H).astype(f32)

    # Additive attention mask (head-invariant). If batch-invariant, keep a single
    # (S, S) f32 copy VMEM-resident instead of streaming (B, S, S) from HBM.
    am = jnp.asarray(attention_mask)
    if am.ndim == 4:
        am = am[:, 0]
    elif am.ndim == 2:
        am = am[None]
    if am.ndim != 3 or am.shape[-2:] != (S, S):
        raise ValueError(f"unsupported attention_mask shape {attention_mask.shape}")
    if am.shape[0] == 1:
        mask = am[0].astype(f32)                                   # shared (S, S)
        mask_spec = pl.BlockSpec((tq, S), lambda b, t: (t, 0))
        mask_block_bytes = tq * S * 4
    else:
        mask = jnp.broadcast_to(am, (B, S, S)).astype(bf16)        # per-batch, halved DMA
        mask_spec = pl.BlockSpec((None, tq, S), lambda b, t: (b, t, 0))
        mask_block_bytes = tq * S * 2

    kernel = functools.partial(
        _self_attention_kernel,
        num_heads=num_heads, head_dim=head_dim, q_tile=tq, eps=eps)

    const = lambda b, t: (0, 0)

    # Explicit VMEM budgeting (raises v5e's 16 MiB scoped default, stays <= v7x physical).
    weight_bytes = (wq.nbytes + wkv.nbytes + wo.nbytes + bq.nbytes + bkv.nbytes
                    + bo.nbytes + lnw.nbytes + lnb.nbytes)
    block_bytes = (S * H * x.dtype.itemsize        # x (full sequence per batch)
                   + mask_block_bytes              # mask tile
                   + tq * H * x.dtype.itemsize)    # output tile
    est = 2 * (weight_bytes + block_bytes) + tq * H * 2   # double-buffered + ctx scratch
    vmem_limit = int(min(max(4 * est, 32 * 1024 * 1024), 64 * 1024 * 1024))

    flops = (2 * B * S * H * 3 * H                          # QKV projections
             + 2 * 2 * B * num_heads * S * S * head_dim     # QK^T + PV
             + 2 * B * S * H * H)                           # output projection
    cost = pl.CostEstimate(
        flops=int(flops),
        transcendentals=int(B * num_heads * S * S),
        bytes_accessed=int(2 * B * S * H * x.dtype.itemsize + weight_bytes + mask.nbytes))

    return pl.pallas_call(
        kernel,
        out_shape=jax.ShapeDtypeStruct((B, S, H), x.dtype),
        grid_spec=pltpu.PrefetchScalarGridSpec(
            num_scalar_prefetch=0,
            grid=(B, n_q),
            in_specs=[
                pl.BlockSpec((None, S, H), lambda b, t: (b, 0, 0)),  # x: full seq / batch
                mask_spec,                                           # additive mask tile
                pl.BlockSpec((H, H), const),                         # W_q (bf16, resident)
                pl.BlockSpec((1, H), const),                         # b_q
                pl.BlockSpec((H, 2 * H), const),                     # W_kv (bf16, resident)
                pl.BlockSpec((1, 2 * H), const),                     # b_kv
                pl.BlockSpec((H, H), const),                         # W_o (bf16, resident)
                pl.BlockSpec((1, H), const),                         # b_o
                pl.BlockSpec((1, H), const),                         # LayerNorm weight
                pl.BlockSpec((1, H), const),                         # LayerNorm bias
            ],
            out_specs=pl.BlockSpec((None, tq, H), lambda b, t: (b, t, 0)),
            scratch_shapes=[pltpu.VMEM((tq, H), jnp.bfloat16)],      # per-head ctx slab
        ),
        compiler_params=pltpu.CompilerParams(
            dimension_semantics=("parallel", "parallel"),
            vmem_limit_bytes=vmem_limit,
        ),
        cost_estimate=cost,
    )(x, mask, wq, bq, wkv, bkv, wo, bo, lnw, lnb)


def _reference(x, mask4, p, num_heads, eps=1e-12):
    B, S, H = x.shape
    d = H // num_heads
    q = x @ p["wq"] + p["bq"]
    k = x @ p["wk"] + p["bk"]
    v = x @ p["wv"] + p["bv"]

    def split(t):
        return t.reshape(B, S, num_heads, d).transpose(0, 2, 1, 3)  # (B, nH, S, d)

    q, k, v = split(q), split(k), split(v)
    scores = jnp.einsum("bhqd,bhkd->bhqk", q, k) / math.sqrt(d) + mask4
    probs = jax.nn.softmax(scores, axis=-1)
    ctx = jnp.einsum("bhqk,bhkd->bhqd", probs, v)
    ctx = ctx.transpose(0, 2, 1, 3).reshape(B, S, H)
    hs = ctx @ p["wo"] + p["bo"] + x
    u = hs.mean(-1, keepdims=True)
    s = ((hs - u) ** 2).mean(-1, keepdims=True)
    return p["ln_w"] * ((hs - u) / jnp.sqrt(s + eps)) + p["ln_b"]


if __name__ == "__main__":
    key = jax.random.PRNGKey(0)
    batch, seq, hidden, num_heads = 2, 8, 32, 2

    keys = jax.random.split(key, 10)
    x = jax.random.normal(keys[0], (batch, seq, hidden), dtype=jnp.float32)

    scale = 0.02
    params = {
        "wq": scale * jax.random.normal(keys[1], (hidden, hidden), dtype=jnp.float32),
        "wk": scale * jax.random.normal(keys[2], (hidden, hidden), dtype=jnp.float32),
        "wv": scale * jax.random.normal(keys[3], (hidden, hidden), dtype=jnp.float32),
        "wo": scale * jax.random.normal(keys[4], (hidden, hidden), dtype=jnp.float32),
        "bq": scale * jax.random.normal(keys[5], (hidden,), dtype=jnp.float32),
        "bk": scale * jax.random.normal(keys[6], (hidden,), dtype=jnp.float32),
        "bv": scale * jax.random.normal(keys[7], (hidden,), dtype=jnp.float32),
        "bo": scale * jax.random.normal(keys[8], (hidden,), dtype=jnp.float32),
        "ln_w": jnp.ones((hidden,), dtype=jnp.float32),
        "ln_b": jnp.zeros((hidden,), dtype=jnp.float32),
    }

    # BERT/MSFRec-style additive causal mask, batch-invariant: (1, 1, S, S).
    causal = jnp.tril(jnp.ones((seq, seq), dtype=jnp.float32))
    attention_mask = ((1.0 - causal) * -10000.0)[None, None]

    y = self_attention(x, attention_mask, params, num_heads=num_heads)
    y = jax.block_until_ready(y)

    ref = _reference(x, attention_mask, params, num_heads)
    assert y.shape == (batch, seq, hidden)
    # bf16 MXU operands + approximate softmax reciprocal => looser tolerance than pure f32.
    assert jnp.allclose(y, ref, atol=2e-2, rtol=2e-2), "mismatch vs reference"

    print("KERNEL_OK")
</pallas_src>

<mosaic_0001>
module attributes {stable_mosaic.version = 11 : i64} {
  func.func @_self_attention_kernel(%arg0: i32, %arg1: i32, %arg2: memref<1x8x32xf32, #tpu.memory_space<vmem>>, %arg3: memref<8x8xf32, #tpu.memory_space<vmem>>, %arg4: memref<32x32xbf16, #tpu.memory_space<vmem>>, %arg5: memref<1x32xf32, #tpu.memory_space<vmem>>, %arg6: memref<32x64xbf16, #tpu.memory_space<vmem>>, %arg7: memref<1x64xf32, #tpu.memory_space<vmem>>, %arg8: memref<32x32xbf16, #tpu.memory_space<vmem>>, %arg9: memref<1x32xf32, #tpu.memory_space<vmem>>, %arg10: memref<1x32xf32, #tpu.memory_space<vmem>>, %arg11: memref<1x32xf32, #tpu.memory_space<vmem>>, %arg12: memref<1x8x32xf32, #tpu.memory_space<vmem>>, %arg13: memref<8x32xbf16, #tpu.memory_space<vmem>>) attributes {dimension_semantics = [#tpu.dimension_semantics<parallel>, #tpu.dimension_semantics<parallel>], iteration_bounds = array<i64: 2, 1>, scalar_prefetch = 0 : i64, scratch_operands = 1 : i64, tpu.core_type = #tpu.core_type<tc>, window_params = [{transform_indices = @transform_0, window_bounds = array<i64: 1, 8, 32>}, {transform_indices = @transform_1, window_bounds = array<i64: 8, 8>}, {pipeline_mode = #tpu.pipeline_mode<synchronous>, transform_indices = @transform_2, window_bounds = array<i64: 32, 32>}, {pipeline_mode = #tpu.pipeline_mode<synchronous>, transform_indices = @transform_3, window_bounds = array<i64: 1, 32>}, {pipeline_mode = #tpu.pipeline_mode<synchronous>, transform_indices = @transform_4, window_bounds = array<i64: 32, 64>}, {pipeline_mode = #tpu.pipeline_mode<synchronous>, transform_indices = @transform_5, window_bounds = array<i64: 1, 64>}, {pipeline_mode = #tpu.pipeline_mode<synchronous>, transform_indices = @transform_6, window_bounds = array<i64: 32, 32>}, {pipeline_mode = #tpu.pipeline_mode<synchronous>, transform_indices = @transform_7, window_bounds = array<i64: 1, 32>}, {pipeline_mode = #tpu.pipeline_mode<synchronous>, transform_indices = @transform_8, window_bounds = array<i64: 1, 32>}, {pipeline_mode = #tpu.pipeline_mode<synchronous>, transform_indices = @transform_9, window_bounds = array<i64: 1, 32>}, {transform_indices = @transform_10, window_bounds = array<i64: 1, 8, 32>}]} {
    %c0 = arith.constant 0 : index
    %c0_0 = arith.constant 0 : index
    %c0_1 = arith.constant 0 : index
    %0 = vector.load %arg2[%c0, %c0_0, %c0_1] : memref<1x8x32xf32, #tpu.memory_space<vmem>>, vector<1x8x32xf32>
    %1 = vector.shape_cast %0 : vector<1x8x32xf32> to vector<8x32xf32>
    %2 = arith.truncf %1 : vector<8x32xf32> to vector<8x32xbf16>
    %3 = arith.truncf %1 : vector<8x32xf32> to vector<8x32xbf16>
    %c0_2 = arith.constant 0 : index
    %c0_3 = arith.constant 0 : index
    %4 = vector.load %arg4[%c0_2, %c0_3] : memref<32x32xbf16, #tpu.memory_space<vmem>>, vector<32x32xbf16>
    %cst = arith.constant dense<0.000000e+00> : vector<8x32xf32>
    %5 = tpu.matmul %2, %4, %cst {dimension_numbers = #tpu.dot_dimension_numbers<[1], [0], [0], [1], [0, 0, 1, 1], [], []>} : vector<8x32xbf16>, vector<32x32xbf16>, vector<8x32xf32> -> vector<8x32xf32>
    %c0_4 = arith.constant 0 : index
    %c0_5 = arith.constant 0 : index
    %6 = vector.load %arg5[%c0_4, %c0_5] : memref<1x32xf32, #tpu.memory_space<vmem>>, vector<1x32xf32>
    %7 = vector.broadcast %6 : vector<1x32xf32> to vector<8x32xf32>
    %8 = arith.addf %5, %7 : vector<8x32xf32>
    %cst_6 = arith.constant 2.500000e-01 : f32
    %9 = vector.broadcast %cst_6 : f32 to vector<8x32xf32>
    %10 = arith.mulf %8, %9 : vector<8x32xf32>
    %c0_7 = arith.constant 0 : index
    %c0_8 = arith.constant 0 : index
    %11 = vector.load %arg6[%c0_7, %c0_8] : memref<32x64xbf16, #tpu.memory_space<vmem>>, vector<32x64xbf16>
    %cst_9 = arith.constant dense<0.000000e+00> : vector<8x64xf32>
    %12 = tpu.matmul %3, %11, %cst_9 {dimension_numbers = #tpu.dot_dimension_numbers<[1], [0], [0], [1], [0, 0, 1, 1], [], []>} : vector<8x32xbf16>, vector<32x64xbf16>, vector<8x64xf32> -> vector<8x64xf32>
    %c0_10 = arith.constant 0 : index
    %c0_11 = arith.constant 0 : index
    %13 = vector.load %arg7[%c0_10, %c0_11] : memref<1x64xf32, #tpu.memory_space<vmem>>, vector<1x64xf32>
    %14 = vector.broadcast %13 : vector<1x64xf32> to vector<8x64xf32>
    %15 = arith.addf %12, %14 : vector<8x64xf32>
    %c0_12 = arith.constant 0 : index
    %c0_13 = arith.constant 0 : index
    %16 = vector.load %arg3[%c0_12, %c0_13] : memref<8x8xf32, #tpu.memory_space<vmem>>, vector<8x8xf32>
    %17 = vector.extract_strided_slice %10 {offsets = [0, 0], sizes = [8, 16], strides = [1, 1]} : vector<8x32xf32> to vector<8x16xf32>
    %18 = arith.truncf %17 : vector<8x16xf32> to vector<8x16xbf16>
    %19 = vector.extract_strided_slice %15 {offsets = [0, 0], sizes = [8, 16], strides = [1, 1]} : vector<8x64xf32> to vector<8x16xf32>
    %20 = arith.truncf %19 : vector<8x16xf32> to vector<8x16xbf16>
    %21 = vector.extract_strided_slice %15 {offsets = [0, 32], sizes = [8, 16], strides = [1, 1]} : vector<8x64xf32> to vector<8x16xf32>
    %22 = arith.truncf %21 : vector<8x16xf32> to vector<8x16xbf16>
    %cst_14 = arith.constant dense<0.000000e+00> : vector<8x8xf32>
    %23 = tpu.matmul %18, %20, %cst_14 {dimension_numbers = #tpu.dot_dimension_numbers<[1], [1], [0], [0], [0, 0, 1, 0], [], []>} : vector<8x16xbf16>, vector<8x16xbf16>, vector<8x8xf32> -> vector<8x8xf32>
    %24 = arith.addf %23, %16 : vector<8x8xf32>
    %cst_15 = arith.constant dense<0xFF800000> : vector<8xf32>
    %25 = vector.multi_reduction <maximumf>, %24, %cst_15 [1] : vector<8x8xf32> to vector<8xf32>
    %26 = vector.shape_cast %25 : vector<8xf32> to vector<8x1xf32>
    %27 = vector.broadcast %26 : vector<8x1xf32> to vector<8x8xf32>
    %28 = arith.subf %24, %27 : vector<8x8xf32>
    %29 = math.exp %28 : vector<8x8xf32>
    %cst_16 = arith.constant dense<0.000000e+00> : vector<8xf32>
    %30 = vector.multi_reduction <add>, %29, %cst_16 [1] : vector<8x8xf32> to vector<8xf32>
    %31 = vector.shape_cast %30 : vector<8xf32> to vector<8x1xf32>
    %32 = tpu.reciprocal %31 {approx = true} : vector<8x1xf32> -> vector<8x1xf32>
    %33 = arith.truncf %29 : vector<8x8xf32> to vector<8x8xbf16>
    %cst_17 = arith.constant dense<0.000000e+00> : vector<8x16xf32>
    %34 = tpu.matmul %33, %22, %cst_17 {dimension_numbers = #tpu.dot_dimension_numbers<[1], [0], [0], [1], [0, 0, 1, 1], [], []>} : vector<8x8xbf16>, vector<8x16xbf16>, vector<8x16xf32> -> vector<8x16xf32>
    %35 = vector.broadcast %32 : vector<8x1xf32> to vector<8x16xf32>
    %36 = arith.mulf %34, %35 : vector<8x16xf32>
    %37 = arith.truncf %36 : vector<8x16xf32> to vector<8x16xbf16>
    %c0_18 = arith.constant 0 : index
    %c0_19 = arith.constant 0 : index
    %38 = vector.load %arg13[%c0_18, %c0_19] : memref<8x32xbf16, #tpu.memory_space<vmem>>, vector<8x16xbf16>
    tpu.vector_store %arg13[%c0_18, %c0_19], %37 {strides = array<i32>} : memref<8x32xbf16, #tpu.memory_space<vmem>>, vector<8x16xbf16>,
    %39 = vector.extract_strided_slice %10 {offsets = [0, 16], sizes = [8, 16], strides = [1, 1]} : vector<8x32xf32> to vector<8x16xf32>
    %40 = arith.truncf %39 : vector<8x16xf32> to vector<8x16xbf16>
    %41 = vector.extract_strided_slice %15 {offsets = [0, 16], sizes = [8, 16], strides = [1, 1]} : vector<8x64xf32> to vector<8x16xf32>
    %42 = arith.truncf %41 : vector<8x16xf32> to vector<8x16xbf16>
    %43 = vector.extract_strided_slice %15 {offsets = [0, 48], sizes = [8, 16], strides = [1, 1]} : vector<8x64xf32> to vector<8x16xf32>
    %44 = arith.truncf %43 : vector<8x16xf32> to vector<8x16xbf16>
    %cst_20 = arith.constant dense<0.000000e+00> : vector<8x8xf32>
    %45 = tpu.matmul %40, %42, %cst_20 {dimension_numbers = #tpu.dot_dimension_numbers<[1], [1], [0], [0], [0, 0, 1, 0], [], []>} : vector<8x16xbf16>, vector<8x16xbf16>, vector<8x8xf32> -> vector<8x8xf32>
    %46 = arith.addf %45, %16 : vector<8x8xf32>
    %cst_21 = arith.constant dense<0xFF800000> : vector<8xf32>
    %47 = vector.multi_reduction <maximumf>, %46, %cst_21 [1] : vector<8x8xf32> to vector<8xf32>
    %48 = vector.shape_cast %47 : vector<8xf32> to vector<8x1xf32>
    %49 = vector.broadcast %48 : vector<8x1xf32> to vector<8x8xf32>
    %50 = arith.subf %46, %49 : vector<8x8xf32>
    %51 = math.exp %50 : vector<8x8xf32>
    %cst_22 = arith.constant dense<0.000000e+00> : vector<8xf32>
    %52 = vector.multi_reduction <add>, %51, %cst_22 [1] : vector<8x8xf32> to vector<8xf32>
    %53 = vector.shape_cast %52 : vector<8xf32> to vector<8x1xf32>
    %54 = tpu.reciprocal %53 {approx = true} : vector<8x1xf32> -> vector<8x1xf32>
    %55 = arith.truncf %51 : vector<8x8xf32> to vector<8x8xbf16>
    %cst_23 = arith.constant dense<0.000000e+00> : vector<8x16xf32>
    %56 = tpu.matmul %55, %44, %cst_23 {dimension_numbers = #tpu.dot_dimension_numbers<[1], [0], [0], [1], [0, 0, 1, 1], [], []>} : vector<8x8xbf16>, vector<8x16xbf16>, vector<8x16xf32> -> vector<8x16xf32>
    %57 = vector.broadcast %54 : vector<8x1xf32> to vector<8x16xf32>
    %58 = arith.mulf %56, %57 : vector<8x16xf32>
    %59 = arith.truncf %58 : vector<8x16xf32> to vector<8x16xbf16>
    %c0_24 = arith.constant 0 : index
    %c16 = arith.constant 16 : index
    %60 = vector.load %arg13[%c0_24, %c16] : memref<8x32xbf16, #tpu.memory_space<vmem>>, vector<8x16xbf16>
    tpu.vector_store %arg13[%c0_24, %c16], %59 {strides = array<i32>} : memref<8x32xbf16, #tpu.memory_space<vmem>>, vector<8x16xbf16>,
    %c0_25 = arith.constant 0 : index
    %c0_26 = arith.constant 0 : index
    %61 = vector.load %arg13[%c0_25, %c0_26] : memref<8x32xbf16, #tpu.memory_space<vmem>>, vector<8x32xbf16>
    %c0_27 = arith.constant 0 : index
    %c0_28 = arith.constant 0 : index
    %62 = vector.load %arg8[%c0_27, %c0_28] : memref<32x32xbf16, #tpu.memory_space<vmem>>, vector<32x32xbf16>
    %cst_29 = arith.constant dense<0.000000e+00> : vector<8x32xf32>
    %63 = tpu.matmul %61, %62, %cst_29 {dimension_numbers = #tpu.dot_dimension_numbers<[1], [0], [0], [1], [0, 0, 1, 1], [], []>} : vector<8x32xbf16>, vector<32x32xbf16>, vector<8x32xf32> -> vector<8x32xf32>
    %c0_30 = arith.constant 0 : index
    %c0_31 = arith.constant 0 : index
    %64 = vector.load %arg9[%c0_30, %c0_31] : memref<1x32xf32, #tpu.memory_space<vmem>>, vector<1x32xf32>
    %65 = vector.broadcast %64 : vector<1x32xf32> to vector<8x32xf32>
    %66 = arith.addf %63, %65 : vector<8x32xf32>
    %67 = arith.addf %66, %1 : vector<8x32xf32>
    %cst_32 = arith.constant dense<0.000000e+00> : vector<8xf32>
    %68 = vector.multi_reduction <add>, %67, %cst_32 [1] : vector<8x32xf32> to vector<8xf32>
    %69 = vector.shape_cast %68 : vector<8xf32> to vector<8x1xf32>
    %cst_33 = arith.constant 3.200000e+01 : f32
    %70 = vector.broadcast %cst_33 : f32 to vector<8x1xf32>
    %71 = arith.divf %69, %70 : vector<8x1xf32>
    %72 = vector.broadcast %71 : vector<8x1xf32> to vector<8x32xf32>
    %73 = arith.subf %67, %72 : vector<8x32xf32>
    %74 = arith.mulf %73, %73 : vector<8x32xf32>
    %cst_34 = arith.constant dense<0.000000e+00> : vector<8xf32>
    %75 = vector.multi_reduction <add>, %74, %cst_34 [1] : vector<8x32xf32> to vector<8xf32>
    %76 = vector.shape_cast %75 : vector<8xf32> to vector<8x1xf32>
    %cst_35 = arith.constant 3.200000e+01 : f32
    %77 = vector.broadcast %cst_35 : f32 to vector<8x1xf32>
    %78 = arith.divf %76, %77 : vector<8x1xf32>
    %cst_36 = arith.constant 9.99999996E-13 : f32
    %79 = vector.broadcast %cst_36 : f32 to vector<8x1xf32>
    %80 = arith.addf %78, %79 : vector<8x1xf32>
    %81 = math.rsqrt %80 : vector<8x1xf32>
    %c0_37 = arith.constant 0 : index
    %c0_38 = arith.constant 0 : index
    %82 = vector.load %arg10[%c0_37, %c0_38] : memref<1x32xf32, #tpu.memory_space<vmem>>, vector<1x32xf32>
    %83 = vector.broadcast %81 : vector<8x1xf32> to vector<8x32xf32>
    %84 = arith.mulf %73, %83 : vector<8x32xf32>
    %85 = vector.broadcast %82 : vector<1x32xf32> to vector<8x32xf32>
    %86 = arith.mulf %85, %84 : vector<8x32xf32>
    %c0_39 = arith.constant 0 : index
    %c0_40 = arith.constant 0 : index
    %87 = vector.load %arg11[%c0_39, %c0_40] : memref<1x32xf32, #tpu.memory_space<vmem>>, vector<1x32xf32>
    %88 = vector.broadcast %87 : vector<1x32xf32> to vector<8x32xf32>
    %89 = arith.addf %86, %88 : vector<8x32xf32>
    %c0_41 = arith.constant 0 : index
    %c0_42 = arith.constant 0 : index
    %c0_43 = arith.constant 0 : index
    %90 = vector.load %arg12[%c0_41, %c0_42, %c0_43] : memref<1x8x32xf32, #tpu.memory_space<vmem>>, vector<1x8x32xf32>
    %91 = vector.shape_cast %90 : vector<1x8x32xf32> to vector<8x32xf32>
    %92 = vector.shape_cast %89 : vector<8x32xf32> to vector<1x8x32xf32>
    tpu.vector_store %arg12[%c0_41, %c0_42, %c0_43], %92 {strides = array<i32>} : memref<1x8x32xf32, #tpu.memory_space<vmem>>, vector<1x8x32xf32>,
    return
  }
  func.func @transform_0(%arg0: i32, %arg1: i32) -> (i32, i32, i32) {
    %c0_i32 = arith.constant 0 : i32
    %c0_i32_0 = arith.constant 0 : i32
    %c0_i32_1 = arith.constant 0 : i32
    return %arg0, %c0_i32, %c0_i32_0 : i32, i32, i32
  }
  func.func @transform_1(%arg0: i32, %arg1: i32) -> (i32, i32) {
    %c0_i32 = arith.constant 0 : i32
    %c0_i32_0 = arith.constant 0 : i32
    return %arg1, %c0_i32 : i32, i32
  }
  func.func @transform_2(%arg0: i32, %arg1: i32) -> (i32, i32) {
    %c0_i32 = arith.constant 0 : i32
    %c0_i32_0 = arith.constant 0 : i32
    %c0_i32_1 = arith.constant 0 : i32
    return %c0_i32, %c0_i32_0 : i32, i32
  }
  func.func @transform_3(%arg0: i32, %arg1: i32) -> (i32, i32) {
    %c0_i32 = arith.constant 0 : i32
    %c0_i32_0 = arith.constant 0 : i32
    %c0_i32_1 = arith.constant 0 : i32
    return %c0_i32, %c0_i32_0 : i32, i32
  }
  func.func @transform_4(%arg0: i32, %arg1: i32) -> (i32, i32) {
    %c0_i32 = arith.constant 0 : i32
    %c0_i32_0 = arith.constant 0 : i32
    %c0_i32_1 = arith.constant 0 : i32
    return %c0_i32, %c0_i32_0 : i32, i32
  }
  func.func @transform_5(%arg0: i32, %arg1: i32) -> (i32, i32) {
    %c0_i32 = arith.constant 0 : i32
    %c0_i32_0 = arith.constant 0 : i32
    %c0_i32_1 = arith.constant 0 : i32
    return %c0_i32, %c0_i32_0 : i32, i32
  }
  func.func @transform_6(%arg0: i32, %arg1: i32) -> (i32, i32) {
    %c0_i32 = arith.constant 0 : i32
    %c0_i32_0 = arith.constant 0 : i32
    %c0_i32_1 = arith.constant 0 : i32
    return %c0_i32, %c0_i32_0 : i32, i32
  }
  func.func @transform_7(%arg0: i32, %arg1: i32) -> (i32, i32) {
    %c0_i32 = arith.constant 0 : i32
    %c0_i32_0 = arith.constant 0 : i32
    %c0_i32_1 = arith.constant 0 : i32
    return %c0_i32, %c0_i32_0 : i32, i32
  }
  func.func @transform_8(%arg0: i32, %arg1: i32) -> (i32, i32) {
    %c0_i32 = arith.constant 0 : i32
    %c0_i32_0 = arith.constant 0 : i32
    %c0_i32_1 = arith.constant 0 : i32
    return %c0_i32, %c0_i32_0 : i32, i32
  }
  func.func @transform_9(%arg0: i32, %arg1: i32) -> (i32, i32) {
    %c0_i32 = arith.constant 0 : i32
    %c0_i32_0 = arith.constant 0 : i32
    %c0_i32_1 = arith.constant 0 : i32
    return %c0_i32, %c0_i32_0 : i32, i32
  }
  func.func @transform_10(%arg0: i32, %arg1: i32) -> (i32, i32, i32) {
    %c0_i32 = arith.constant 0 : i32
    %c0_i32_0 = arith.constant 0 : i32
    return %arg0, %arg1, %c0_i32 : i32, i32, i32
  }
}

</mosaic_0001>

<llo_original>
// kernel: tpu_custom_call.1
$region0: #{tpu_custom_call.1}
  #allocation0 [shape = 'u32[]', space=smem, size = 0x4, offset = 0x4, fixed_abs, tag = 'smem constant byte address 0x4 - core index']
  #allocation1 [shape = 'u32[144,128]{1,0:T(1,128)}', space=vmem, size = 0x12000, scoped, tag = 'internal scratch']
  #allocation2 [shape = 'bf16[8,32]{1,0:T(8,128)(2,1)}', space=vmem, size = 0x800, scoped, tag = 'scratch operand']
  %s0 = inlined_call_operand.hbm [shape: f32[2,8,32], index: 0, kind: input, shape index: {}]
  %s1 = inlined_call_operand.hbm [shape: f32[8,8], index: 1, kind: input, shape index: {}]
  %s2 = inlined_call_operand.hbm [shape: bf16[32,32], index: 2, kind: input, shape index: {}]
  %s3 = inlined_call_operand.vmem [shape: f32[1,32], index: 3, kind: input, shape index: {}]
  %s4 = inlined_call_operand.hbm [shape: bf16[32,64], index: 4, kind: input, shape index: {}]
  %s5 = inlined_call_operand.vmem [shape: f32[1,64], index: 5, kind: input, shape index: {}]
  %s6 = inlined_call_operand.hbm [shape: bf16[32,32], index: 6, kind: input, shape index: {}]
  %s7 = inlined_call_operand.vmem [shape: f32[1,32], index: 7, kind: input, shape index: {}]
  %s8 = inlined_call_operand.vmem [shape: f32[1,32], index: 8, kind: input, shape index: {}]
  %s9 = inlined_call_operand.vmem [shape: f32[1,32], index: 9, kind: input, shape index: {}]
  %s10 = inlined_call_operand.hbm [shape: f32[2,8,32], index: 10, kind: output, shape index: {}]
  %s11 = sld [smem:[#allocation0]]
  $region93: #{tpu_custom_call.1} parent=0
    _
  %s13 = ssub.s32 1, %s11
  %s14 = scalar_select 0, %s13, %s11
  $region1: #{tpu_custom_call.1} parent=0
    #allocation3 [shape = 'u8[8192]{0}', space=vmem, size = 0x2000, scoped, tag = 'input window, operand 0']
    #allocation4 [shape = 's32[2]{0}', space=sflag, size = 0x8, scoped, tag = 'scoped memory for tpu_custom_call.1']
    #allocation5 [shape = 's32[2]{0}', space=sflag, size = 0x8, scoped, tag = 'scoped memory for tpu_custom_call.1']
    #allocation6 [shape = 'u8[4096]{0}', space=vmem, size = 0x1000, scoped, tag = 'input window, operand 1, single buffered']
    #allocation7 [shape = 's32[1]{0}', space=sflag, size = 0x4, scoped, tag = 'scoped memory for tpu_custom_call.1']
    #allocation8 [shape = 'u8[8192]{0}', space=vmem, size = 0x2000, scoped, tag = 'input window, operand 2, single buffered']
    #allocation9 [shape = 'u8[8192]{0}', space=vmem, size = 0x2000, scoped, tag = 'input window, operand 4, single buffered']
    #allocation10 [shape = 's32[1]{0}', space=sflag, size = 0x4, scoped, tag = 'scoped memory for tpu_custom_call.1']
    #allocation11 [shape = 'u8[8192]{0}', space=vmem, size = 0x2000, scoped, tag = 'input window, operand 6, single buffered']
    #allocation12 [shape = 'u8[8192]{0}', space=vmem, size = 0x2000, scoped, tag = 'output window, operand 0']
    %15 = vsyncpa [#allocation4], 0
    %s16 = scalar_lea.sflag [#allocation4], 1
    %17 = vsyncpa %s16, 0
    %18 = vsyncpa [#allocation7], 0
    %19 = vsyncpa [#allocation10], 0
    %20 = vsyncpa [#allocation5], 0
    %s21 = scalar_lea.sflag [#allocation5], 1
    %22 = vsyncpa %s21, 0
    loop: start=0, step=1, limit=4
    $region2: #{tpu_custom_call.1} parent=1 // loop_pre_header
      _
    $region3: #{tpu_custom_call.1} parent=1 // loop_header
      %s24 = sphi 0, %s28
      %p25 = scmp.ge.s32.totalorder %s24, 4
      %s31 = sphi 0, %s43
      %s32 = sphi 0, %s39
      %s33 = sphi 0, %s31
      %s34 = sphi 0, %s32
      %s35 = sphi 0, %s33
      %s36 = sphi 0, %s34
      %s46 = sphi 0, %s48
      %s49 = sphi 0, %s46
      %s50 = sphi 0, %s49
      %s66 = sphi 0, %s50
      %s72 = sphi 0, %s74
      %s75 = sphi 0, %s72
      %s76 = sphi 0, %s75
      %s92 = sphi 0, %s76
      %s96 = sphi 0, %s96
      %s98 = sphi 0, %s96
      %s99 = sphi 0, %s98
      %s113 = sphi 0, %s99
      %s117 = sphi 0, %s117
      %s119 = sphi 0, %s117
      %s120 = sphi 0, %s119
      %s134 = sphi 0, %s120
      %s138 = sphi 0, %s138
      %s140 = sphi 0, %s138
      %s141 = sphi 0, %s140
      %s155 = sphi 0, %s141
      %s159 = sphi 0, %s159
      %s161 = sphi 0, %s159
      %s162 = sphi 0, %s161
      %s176 = sphi 0, %s162
      %s180 = sphi 0, %s180
      %s182 = sphi 0, %s180
      %s183 = sphi 0, %s182
      %s197 = sphi 0, %s183
      %s201 = sphi 0, %s201
      %s203 = sphi 0, %s201
      %s204 = sphi 0, %s203
      %s218 = sphi 0, %s204
      %s222 = sphi 0, %s222
      %s224 = sphi 0, %s222
      %s225 = sphi 0, %s224
      %s239 = sphi 0, %s225
      %s243 = sphi 0, %s243
      %s245 = sphi 0, %s243
      %s246 = sphi 0, %s245
      %s260 = sphi 0, %s246
      %s268 = sphi 0, %s270
      %s271 = sphi 0, %s268
      %s272 = sphi 0, %s271
      %s288 = sphi 0, %s272
    $region4: #{tpu_custom_call.1} parent=1 // loop_header_branch
      %27 = sbr.rel (%p25) target = $region8
    $region5: #{tpu_custom_call.1} parent=1 // loop_body
      %s29 = ssub.s32 %s24, 1
      %s30 = ssub.s32 %s24, 2
      %s37 = sadd.s32 1, %s32
      %p38 = scmp.ge.s32.totalorder %s37, 1
      %s39 = scalar_select %p38, 0, %s37
      %s40 = sadd.s32 1, %s31
      %s41 = scalar_select %p38, %s40, %s31
      %p42 = scmp.ge.s32.totalorder %s41, 2
      %s43 = scalar_select %p42, 0, %s41
      %s44 = ssub.s32 %s31, %s43
      %p45 = scmp.eq.s32.totalorder %s44, 0
      %s47 = sadd.s32 %s46, 1
      %s48 = scalar_select %p45, %s46, %s47
      %p51 = pneg %p45
      %p52 = scmp.eq.s32.totalorder %s24, 1
      %p53 = por %p51, %p52
      %p54 = scmp.ne.s32.totalorder %s46, %s49
      %p55 = scmp.eq.s32.totalorder %s24, 0
      %p56 = por %p54, %p55
      %p57 = scmp.ne.s32.totalorder %s46, %s49
      %p58 = scmp.eq.s32.totalorder %s29, 1
      %p59 = por %p57, %p58
      %p60 = scmp.ne.s32.totalorder %s49, %s50
      %p61 = scmp.eq.s32.totalorder %s29, 0
      %p62 = por %p60, %p61
      %p63 = scmp.ne.s32.totalorder %s49, %s50
      %p64 = scmp.eq.s32.totalorder %s30, 1
      %p65 = por %p63, %p64
      %p67 = scmp.ne.s32.totalorder %s50, %s66
      %p68 = scmp.eq.s32.totalorder %s30, 0
      %p69 = por %p67, %p68
      %s70 = ssub.s32 %s32, %s39
      %p71 = scmp.eq.s32.totalorder %s70, 0
      %s73 = sadd.s32 %s72, 1
      %s74 = scalar_select %p71, %s72, %s73
      %p77 = pneg %p71
      %p78 = scmp.eq.s32.totalorder %s24, 1
      %p79 = por %p77, %p78
      %p80 = scmp.ne.s32.totalorder %s72, %s75
      %p81 = scmp.eq.s32.totalorder %s24, 0
      %p82 = por %p80, %p81
      %p83 = scmp.ne.s32.totalorder %s72, %s75
      %p84 = scmp.eq.s32.totalorder %s29, 1
      %p85 = por %p83, %p84
      %p86 = scmp.ne.s32.totalorder %s75, %s76
      %p87 = scmp.eq.s32.totalorder %s29, 0
      %p88 = por %p86, %p87
      %p89 = scmp.ne.s32.totalorder %s75, %s76
      %p90 = scmp.eq.s32.totalorder %s30, 1
      %p91 = por %p89, %p90
      %p93 = scmp.ne.s32.totalorder %s76, %s92
      %p94 = scmp.eq.s32.totalorder %s30, 0
      %p95 = por %p93, %p94
      %s97 = sadd.s32 %s96, 1
      %p100 = scmp.eq.s32.totalorder %s24, 1
      %p101 = scmp.ne.s32.totalorder %s96, %s98
      %p102 = scmp.eq.s32.totalorder %s24, 0
      %p103 = por %p101, %p102
      %p104 = scmp.ne.s32.totalorder %s96, %s98
      %p105 = scmp.eq.s32.totalorder %s29, 1
      %p106 = por %p104, %p105
      %p107 = scmp.ne.s32.totalorder %s98, %s99
      %p108 = scmp.eq.s32.totalorder %s29, 0
      %p109 = por %p107, %p108
      %p110 = scmp.ne.s32.totalorder %s98, %s99
      %p111 = scmp.eq.s32.totalorder %s30, 1
      %p112 = por %p110, %p111
      %p114 = scmp.ne.s32.totalorder %s99, %s113
      %p115 = scmp.eq.s32.totalorder %s30, 0
      %p116 = por %p114, %p115
      %s118 = sadd.s32 %s117, 1
      %p121 = scmp.eq.s32.totalorder %s24, 1
      %p122 = scmp.ne.s32.totalorder %s117, %s119
      %p123 = scmp.eq.s32.totalorder %s24, 0
      %p124 = por %p122, %p123
      %p125 = scmp.ne.s32.totalorder %s117, %s119
      %p126 = scmp.eq.s32.totalorder %s29, 1
      %p127 = por %p125, %p126
      %p128 = scmp.ne.s32.totalorder %s119, %s120
      %p129 = scmp.eq.s32.totalorder %s29, 0
      %p130 = por %p128, %p129
      %p131 = scmp.ne.s32.totalorder %s119, %s120
      %p132 = scmp.eq.s32.totalorder %s30, 1
      %p133 = por %p131, %p132
      %p135 = scmp.ne.s32.totalorder %s120, %s134
      %p136 = scmp.eq.s32.totalorder %s30, 0
      %p137 = por %p135, %p136
      %s139 = sadd.s32 %s138, 1
      %p142 = scmp.eq.s32.totalorder %s24, 1
      %p143 = scmp.ne.s32.totalorder %s138, %s140
      %p144 = scmp.eq.s32.totalorder %s24, 0
      %p145 = por %p143, %p144
      %p146 = scmp.ne.s32.totalorder %s138, %s140
      %p147 = scmp.eq.s32.totalorder %s29, 1
      %p148 = por %p146, %p147
      %p149 = scmp.ne.s32.totalorder %s140, %s141
      %p150 = scmp.eq.s32.totalorder %s29, 0
      %p151 = por %p149, %p150
      %p152 = scmp.ne.s32.totalorder %s140, %s141
      %p153 = scmp.eq.s32.totalorder %s30, 1
      %p154 = por %p152, %p153
      %p156 = scmp.ne.s32.totalorder %s141, %s155
      %p157 = scmp.eq.s32.totalorder %s30, 0
      %p158 = por %p156, %p157
      %s160 = sadd.s32 %s159, 1
      %p163 = scmp.eq.s32.totalorder %s24, 1
      %p164 = scmp.ne.s32.totalorder %s159, %s161
      %p165 = scmp.eq.s32.totalorder %s24, 0
      %p166 = por %p164, %p165
      %p167 = scmp.ne.s32.totalorder %s159, %s161
      %p168 = scmp.eq.s32.totalorder %s29, 1
      %p169 = por %p167, %p168
      %p170 = scmp.ne.s32.totalorder %s161, %s162
      %p171 = scmp.eq.s32.totalorder %s29, 0
      %p172 = por %p170, %p171
      %p173 = scmp.ne.s32.totalorder %s161, %s162
      %p174 = scmp.eq.s32.totalorder %s30, 1
      %p175 = por %p173, %p174
      %p177 = scmp.ne.s32.totalorder %s162, %s176
      %p178 = scmp.eq.s32.totalorder %s30, 0
      %p179 = por %p177, %p178
      %s181 = sadd.s32 %s180, 1
      %p184 = scmp.eq.s32.totalorder %s24, 1
      %p185 = scmp.ne.s32.totalorder %s180, %s182
      %p186 = scmp.eq.s32.totalorder %s24, 0
      %p187 = por %p185, %p186
      %p188 = scmp.ne.s32.totalorder %s180, %s182
      %p189 = scmp.eq.s32.totalorder %s29, 1
      %p190 = por %p188, %p189
      %p191 = scmp.ne.s32.totalorder %s182, %s183
      %p192 = scmp.eq.s32.totalorder %s29, 0
      %p193 = por %p191, %p192
      %p194 = scmp.ne.s32.totalorder %s182, %s183
      %p195 = scmp.eq.s32.totalorder %s30, 1
      %p196 = por %p194, %p195
      %p198 = scmp.ne.s32.totalorder %s183, %s197
      %p199 = scmp.eq.s32.totalorder %s30, 0
      %p200 = por %p198, %p199
      %s202 = sadd.s32 %s201, 1
      %p205 = scmp.eq.s32.totalorder %s24, 1
      %p206 = scmp.ne.s32.totalorder %s201, %s203
      %p207 = scmp.eq.s32.totalorder %s24, 0
      %p208 = por %p206, %p207
      %p209 = scmp.ne.s32.totalorder %s201, %s203
      %p210 = scmp.eq.s32.totalorder %s29, 1
      %p211 = por %p209, %p210
      %p212 = scmp.ne.s32.totalorder %s203, %s204
      %p213 = scmp.eq.s32.totalorder %s29, 0
      %p214 = por %p212, %p213
      %p215 = scmp.ne.s32.totalorder %s203, %s204
      %p216 = scmp.eq.s32.totalorder %s30, 1
      %p217 = por %p215, %p216
      %p219 = scmp.ne.s32.totalorder %s204, %s218
      %p220 = scmp.eq.s32.totalorder %s30, 0
      %p221 = por %p219, %p220
      %s223 = sadd.s32 %s222, 1
      %p226 = scmp.eq.s32.totalorder %s24, 1
      %p227 = scmp.ne.s32.totalorder %s222, %s224
      %p228 = scmp.eq.s32.totalorder %s24, 0
      %p229 = por %p227, %p228
      %p230 = scmp.ne.s32.totalorder %s222, %s224
      %p231 = scmp.eq.s32.totalorder %s29, 1
      %p232 = por %p230, %p231
      %p233 = scmp.ne.s32.totalorder %s224, %s225
      %p234 = scmp.eq.s32.totalorder %s29, 0
      %p235 = por %p233, %p234
      %p236 = scmp.ne.s32.totalorder %s224, %s225
      %p237 = scmp.eq.s32.totalorder %s30, 1
      %p238 = por %p236, %p237
      %p240 = scmp.ne.s32.totalorder %s225, %s239
      %p241 = scmp.eq.s32.totalorder %s30, 0
      %p242 = por %p240, %p241
      %s244 = sadd.s32 %s243, 1
      %p247 = scmp.eq.s32.totalorder %s24, 1
      %p248 = scmp.ne.s32.totalorder %s243, %s245
      %p249 = scmp.eq.s32.totalorder %s24, 0
      %p250 = por %p248, %p249
      %p251 = scmp.ne.s32.totalorder %s243, %s245
      %p252 = scmp.eq.s32.totalorder %s29, 1
      %p253 = por %p251, %p252
      %p254 = scmp.ne.s32.totalorder %s245, %s246
      %p255 = scmp.eq.s32.totalorder %s29, 0
      %p256 = por %p254, %p255
      %p257 = scmp.ne.s32.totalorder %s245, %s246
      %p258 = scmp.eq.s32.totalorder %s30, 1
      %p259 = por %p257, %p258
      %p261 = scmp.ne.s32.totalorder %s246, %s260
      %p262 = scmp.eq.s32.totalorder %s30, 0
      %p263 = por %p261, %p262
      %s264 = ssub.s32 %s31, %s43
      %s265 = ssub.s32 %s32, %s39
      %s266 = sor.u32 %s264, %s265
      %p267 = scmp.eq.s32.totalorder %s266, 0
      %s269 = sadd.s32 %s268, 1
      %s270 = scalar_select %p267, %s268, %s269
      %p273 = pneg %p267
      %p274 = scmp.eq.s32.totalorder %s24, 1
      %p275 = por %p273, %p274
      %p276 = scmp.ne.s32.totalorder %s268, %s271
      %p277 = scmp.eq.s32.totalorder %s24, 0
      %p278 = por %p276, %p277
      %p279 = scmp.ne.s32.totalorder %s268, %s271
      %p280 = scmp.eq.s32.totalorder %s29, 1
      %p281 = por %p279, %p280
      %p282 = scmp.ne.s32.totalorder %s271, %s272
      %p283 = scmp.eq.s32.totalorder %s29, 0
      %p284 = por %p282, %p283
      %p285 = scmp.ne.s32.totalorder %s271, %s272
      %p286 = scmp.eq.s32.totalorder %s30, 1
      %p287 = por %p285, %p286
      %p289 = scmp.ne.s32.totalorder %s272, %s288
      %p290 = scmp.eq.s32.totalorder %s30, 0
      %p291 = por %p289, %p290
      %p292 = scmp.le.s32.totalorder 1, %s24
      %p293 = scmp.lt.s32.totalorder %s24, 3
      %p294 = pnand %p292, %p293
      %p295 = pneg %p294
      // Predicated region
      $region9: #{tpu_custom_call.1} parent=5 // pred_check
        _
      $region10: #{tpu_custom_call.1} parent=5 // pred_check_branch
        %297 = sbr.rel (%p294) target = $region12
      $region11: #{tpu_custom_call.1} parent=5 // pred_region
        %s298 = ssub.s32 %s24, 1
        // Predicated region
        $region13: #{tpu_custom_call.1} parent=11 // pred_check
          %p299 = pneg %p88
        $region14: #{tpu_custom_call.1} parent=11 // pred_check_branch
          %301 = sbr.rel (%p299) target = $region16
        $region15: #{tpu_custom_call.1} parent=11 // pred_region
          %s303 = ssub.s32 128, 128
          %304 = vsyncadd [#allocation7], %s303
          %s305 = smul.addr %s34, 128
          %s306 = scalar_lea.hbm %s1, %s305
          %s308 = sshll.u32 [#allocation6], 4
          %s309 = int_to_ptr.vmem [resolvable:$true] %s308
          %311 = dma.hbm_to_vmem [thread:$0]  %s306, 128, %s309, [#allocation7]
        $region16: #{tpu_custom_call.1} parent=11 // pred_fallthru
          _
        // Predicated region
        $region17: #{tpu_custom_call.1} parent=11 // pred_check
          %p312 = pneg %p109
        $region18: #{tpu_custom_call.1} parent=11 // pred_check_branch
          %314 = sbr.rel (%p312) target = $region20
        $region19: #{tpu_custom_call.1} parent=11 // pred_region
          %s316 = ssub.s32 256, 256
          %317 = vsyncadd [#allocation7], %s316
          %s318 = sshll.u32 [#allocation8], 4
          %s319 = int_to_ptr.vmem [resolvable:$true] %s318
          %324 = dma.hbm_to_vmem [thread:$0]  %s2, 256, %s319, [#allocation7], 64, 64, 4
        $region20: #{tpu_custom_call.1} parent=11 // pred_fallthru
          _
        // Predicated region
        $region21: #{tpu_custom_call.1} parent=11 // pred_check
          %p325 = pneg %p130
        $region22: #{tpu_custom_call.1} parent=11 // pred_check_branch
          %327 = sbr.rel (%p325) target = $region24
        $region23: #{tpu_custom_call.1} parent=11 // pred_region
          _
        $region24: #{tpu_custom_call.1} parent=11 // pred_fallthru
          _
        // Predicated region
        $region25: #{tpu_custom_call.1} parent=11 // pred_check
          %p328 = pneg %p151
        $region26: #{tpu_custom_call.1} parent=11 // pred_check_branch
          %330 = sbr.rel (%p328) target = $region28
        $region27: #{tpu_custom_call.1} parent=11 // pred_region
          %s332 = ssub.s32 256, 256
          %333 = vsyncadd [#allocation10], %s332
          %s334 = sshll.u32 [#allocation9], 4
          %s335 = int_to_ptr.vmem [resolvable:$true] %s334
          %340 = dma.hbm_to_vmem [thread:$0]  %s4, 256, %s335, [#allocation10], 64, 64, 4
        $region28: #{tpu_custom_call.1} parent=11 // pred_fallthru
          _
        // Predicated region
        $region29: #{tpu_custom_call.1} parent=11 // pred_check
          %p341 = pneg %p172
        $region30: #{tpu_custom_call.1} parent=11 // pred_check_branch
          %343 = sbr.rel (%p341) target = $region32
        $region31: #{tpu_custom_call.1} parent=11 // pred_region
          _
        $region32: #{tpu_custom_call.1} parent=11 // pred_fallthru
          _
        // Predicated region
        $region33: #{tpu_custom_call.1} parent=11 // pred_check
          %p344 = pneg %p193
        $region34: #{tpu_custom_call.1} parent=11 // pred_check_branch
          %346 = sbr.rel (%p344) target = $region36
        $region35: #{tpu_custom_call.1} parent=11 // pred_region
          %s348 = ssub.s32 256, 256
          %349 = vsyncadd [#allocation10], %s348
          %s350 = sshll.u32 [#allocation11], 4
          %s351 = int_to_ptr.vmem [resolvable:$true] %s350
          %356 = dma.hbm_to_vmem [thread:$0]  %s6, 256, %s351, [#allocation10], 64, 64, 4
        $region36: #{tpu_custom_call.1} parent=11 // pred_fallthru
          _
        // Predicated region
        $region37: #{tpu_custom_call.1} parent=11 // pred_check
          %p357 = pneg %p214
        $region38: #{tpu_custom_call.1} parent=11 // pred_check_branch
          %359 = sbr.rel (%p357) target = $region40
        $region39: #{tpu_custom_call.1} parent=11 // pred_region
          _
        $region40: #{tpu_custom_call.1} parent=11 // pred_fallthru
          _
        // Predicated region
        $region41: #{tpu_custom_call.1} parent=11 // pred_check
          %p360 = pneg %p235
        $region42: #{tpu_custom_call.1} parent=11 // pred_check_branch
          %362 = sbr.rel (%p360) target = $region44
        $region43: #{tpu_custom_call.1} parent=11 // pred_region
          _
        $region44: #{tpu_custom_call.1} parent=11 // pred_fallthru
          _
        // Predicated region
        $region45: #{tpu_custom_call.1} parent=11 // pred_check
          %p363 = pneg %p256
        $region46: #{tpu_custom_call.1} parent=11 // pred_check_branch
          %365 = sbr.rel (%p363) target = $region48
        $region47: #{tpu_custom_call.1} parent=11 // pred_region
          _
        $region48: #{tpu_custom_call.1} parent=11 // pred_fallthru
          _
      $region12: #{tpu_custom_call.1} parent=5 // pred_fallthru
        _
      %p366 = scmp.lt.s32.totalorder %s24, 2
      // Predicated region
      $region49: #{tpu_custom_call.1} parent=5 // pred_check
        %p367 = pneg %p366
      $region50: #{tpu_custom_call.1} parent=5 // pred_check_branch
        %369 = sbr.rel (%p367) target = $region52
      $region51: #{tpu_custom_call.1} parent=5 // pred_region
        // Predicated region
        $region53: #{tpu_custom_call.1} parent=51 // pred_check
          %p370 = pneg %p56
        $region54: #{tpu_custom_call.1} parent=51 // pred_check_branch
          %372 = sbr.rel (%p370) target = $region56
        $region55: #{tpu_custom_call.1} parent=51 // pred_region
          %s373 = sand.u32 %s46, 1
          %s374 = scalar_lea.sflag [#allocation4], %s373
          %s375 = sand.u32 %s46, 1
          %s376 = smul.addr %s375, 8
          %s377 = scalar_lea.vmem [#allocation3], %s376
          %s379 = ssub.s32 128, 128
          %380 = vsyncadd %s374, %s379
          %s381 = smul.addr %s31, 128
          %s382 = scalar_lea.hbm %s0, %s381
          %s384 = sshll.u32 %s377, 4
          %s385 = int_to_ptr.vmem [resolvable:$true] %s384
          %387 = dma.hbm_to_vmem [thread:$0]  %s382, 128, %s385, %s374
        $region56: #{tpu_custom_call.1} parent=51 // pred_fallthru
          _
      $region52: #{tpu_custom_call.1} parent=5 // pred_fallthru
        _
      %p388 = scmp.le.s32.totalorder 1, %s24
      %p389 = scmp.lt.s32.totalorder %s24, 3
      %p390 = pnand %p388, %p389
      %p391 = pneg %p390
      // Predicated region
      $region57: #{tpu_custom_call.1} parent=5 // pred_check
        _
      $region58: #{tpu_custom_call.1} parent=5 // pred_check_branch
        %393 = sbr.rel (%p390) target = $region60
      $region59: #{tpu_custom_call.1} parent=5 // pred_region
        %s394 = ssub.s32 %s24, 1
        %s395 = sand.u32 %s49, 1
        %s396 = scalar_lea.sflag [#allocation4], %s395
        %s397 = sand.u32 %s49, 1
        %s398 = smul.addr %s397, 8
        %s399 = scalar_lea.vmem [#allocation3], %s398
        // Predicated region
        $region61: #{tpu_custom_call.1} parent=59 // pred_check
          %p400 = pneg %p62
        $region62: #{tpu_custom_call.1} parent=59 // pred_check_branch
          %402 = sbr.rel (%p400) target = $region64
        $region63: #{tpu_custom_call.1} parent=59 // pred_region
          %403 = dma.done %s396, 128
        $region64: #{tpu_custom_call.1} parent=59 // pred_fallthru
          _
        // Predicated region
        $region65: #{tpu_custom_call.1} parent=59 // pred_check
          %p404 = pneg %p88
        $region66: #{tpu_custom_call.1} parent=59 // pred_check_branch
          %406 = sbr.rel (%p404) target = $region68
        $region67: #{tpu_custom_call.1} parent=59 // pred_region
          %407 = dma.done [#allocation7], 128
        $region68: #{tpu_custom_call.1} parent=59 // pred_fallthru
          _
        // Predicated region
        $region69: #{tpu_custom_call.1} parent=59 // pred_check
          %p408 = pneg %p109
        $region70: #{tpu_custom_call.1} parent=59 // pred_check_branch
          %410 = sbr.rel (%p408) target = $region72
        $region71: #{tpu_custom_call.1} parent=59 // pred_region
          %411 = dma.done [#allocation7], 256
        $region72: #{tpu_custom_call.1} parent=59 // pred_fallthru
          _
        // Predicated region
        $region73: #{tpu_custom_call.1} parent=59 // pred_check
          %p412 = pneg %p151
        $region74: #{tpu_custom_call.1} parent=59 // pred_check_branch
          %414 = sbr.rel (%p412) target = $region76
        $region75: #{tpu_custom_call.1} parent=59 // pred_region
          %415 = dma.done [#allocation10], 256
        $region76: #{tpu_custom_call.1} parent=59 // pred_fallthru
          _
        // Predicated region
        $region77: #{tpu_custom_call.1} parent=59 // pred_check
          %p416 = pneg %p193
        $region78: #{tpu_custom_call.1} parent=59 // pred_check_branch
          %418 = sbr.rel (%p416) target = $region80
        $region79: #{tpu_custom_call.1} parent=59 // pred_region
          %419 = dma.done [#allocation10], 256
        $region80: #{tpu_custom_call.1} parent=59 // pred_fallthru
          _
        %s420 = sand.u32 %s49, 1
        %s421 = scalar_lea.sflag [#allocation4], %s420
        %s422 = sand.u32 %s49, 1
        %s423 = smul.addr %s422, 8
        %s424 = scalar_lea.vmem [#allocation3], %s423
        %p425 = pneg %p62
        %p426 = pneg %p59
        %p427 = pneg %p88
        %p428 = pneg %p85
        %p429 = pneg %p109
        %p430 = pneg %p106
        %p431 = pneg %p130
        %p432 = pneg %p127
        %p433 = pneg %p151
        %p434 = pneg %p148
        %p435 = pneg %p172
        %p436 = pneg %p169
        %p437 = pneg %p193
        %p438 = pneg %p190
        %p439 = pneg %p214
        %p440 = pneg %p211
        %p441 = pneg %p235
        %p442 = pneg %p232
        %p443 = pneg %p256
        %p444 = pneg %p253
        %p445 = pneg %p284
        %p446 = pneg %p281
        %s447 = sand.u32 %s271, 1
        %s448 = scalar_lea.sflag [#allocation5], %s447
        %s449 = sand.u32 %s271, 1
        %s450 = smul.addr %s449, 8
        %s451 = scalar_lea.vmem [#allocation12], %s450
        %v453 = vld [vmem:[%s399] sm:$0xff]
        %v454 = vpack.c.bf16 %v453, %v453
        %v455 = vld [vmem:[#allocation8] sm:$0xf]
        %v456 = vld [vmem:[#allocation8 + $0x4] sm:$0xf]
        %v457 = vld [vmem:[#allocation8 + $0x8] sm:$0xf]
        %v458 = vld [vmem:[#allocation8 + $0xc] sm:$0xf]
        %v459 = vld [vmem:[%s3] sm:$0x1]
        %v461 = vlaneseq
        %v462 = vshrl.u32 %v461, 7
        %v463 = vsub.s32 0, %v462
        %v464 = vrot.slane %v459, %v463
        %v470 = vunpack.c.l.b16 %v455
        %v471 = vunpack.c.l.b16 %v456
        %v472 = vunpack.c.l.b16 %v457
        %v473 = vunpack.c.l.b16 %v458
        %v474 = vpack.c.b16 %v471, %v470
        %v475 = vpack.c.b16 %v473, %v472
        %vm478 = vcmask 261120
        %v480 = vsel %vm478, %v454, 0
        %482 = vmatprep.subr.bf16.mxu0 0
        %483 = vmatpush1.bf16.msra.mxu0 0
        %484 = vmatprep.subr.bf16.mxu0 0
        %485 = vmatpush1.bf16.msra.mxu0 0
        %486 = vmatprep.subr.bf16.mxu0 0
        %487 = vmatpush1.bf16.msra.mxu0 0
        %488 = vmatprep.subr.bf16.mxu0 0
        %489 = vmatpush1.bf16.msra.mxu0 0
        %490 = vmatprep.subr.bf16.mxu0 0
        %491 = vmatpush1.bf16.msra.mxu0 0
        %492 = vmatprep.subr.bf16.mxu0 0
        %493 = vmatpush1.bf16.msra.mxu0 0
        %494 = vmatprep.subr.bf16.mxu0 0
        %495 = vmatpush1.bf16.msra.mxu0 %v475
        %496 = vmatprep.subr.bf16.mxu0 0
        %497 = vmatpush1.bf16.msra.mxu0 %v474
        %498 = vmatprep.subr.bf16.mxu0 0
        %499 = vmatpush2.bf16.msra.mxu0 0
        %500 = vmatprep.subr.bf16.mxu0 0
        %501 = vmatpush2.bf16.msra.mxu0 0
        %502 = vmatprep.subr.bf16.mxu0 0
        %503 = vmatpush2.bf16.msra.mxu0 0
        %504 = vmatprep.subr.bf16.mxu0 0
        %505 = vmatpush2.bf16.msra.mxu0 0
        %506 = vmatprep.subr.bf16.mxu0 0
        %507 = vmatpush2.bf16.msra.mxu0 0
        %508 = vmatprep.subr.bf16.mxu0 0
        %509 = vmatpush2.bf16.msra.mxu0 0
        %510 = vmatprep.subr.bf16.mxu0 0
        %511 = vmatpush2.bf16.msra.mxu0 0
        %512 = vmatprep.subr.bf16.mxu0 0
        %513 = vmatpush2.bf16.msra.mxu0 0
        %514 = vmatprep.mubr.bf16.mxu0 0
        %515 = vmatmul.mubr.bf16.gmra.mxu0 %v480
        %v516 = vpop.f32.mrf.mxu0
        %v517 = vadd.f32 %v464, %v516
        %v518 = vpop.f32.mrf.mxu0
        %v519 = vpop.f32.mrf.mxu0
        %v520 = vpop.f32.mrf.mxu0
        %521 = vdwg.mxu0
        %v522 = vmul.f32 %v517, 0.25
        %v523 = vld [vmem:[#allocation9] sm:$0xf]
        %v524 = vld [vmem:[#allocation9 + $0x4] sm:$0xf]
        %v525 = vld [vmem:[#allocation9 + $0x8] sm:$0xf]
        %v526 = vld [vmem:[#allocation9 + $0xc] sm:$0xf]
        %v527 = vld [vmem:[%s5] sm:$0x1]
        %v529 = vlaneseq
        %v530 = vshrl.u32 %v529, 7
        %v531 = vsub.s32 0, %v530
        %v532 = vrot.slane %v527, %v531
        %v538 = vunpack.c.l.b16 %v523
        %v539 = vunpack.c.l.b16 %v524
        %v540 = vunpack.c.l.b16 %v525
        %v541 = vunpack.c.l.b16 %v526
        %v542 = vpack.c.b16 %v539, %v538
        %v543 = vpack.c.b16 %v541, %v540
        %546 = vmatprep.subr.bf16.mxu0 0
        %547 = vmatpush1.bf16.msra.mxu0 0
        %548 = vmatprep.subr.bf16.mxu0 0
        %549 = vmatpush1.bf16.msra.mxu0 0
        %550 = vmatprep.subr.bf16.mxu0 0
        %551 = vmatpush1.bf16.msra.mxu0 0
        %552 = vmatprep.subr.bf16.mxu0 0
        %553 = vmatpush1.bf16.msra.mxu0 0
        %554 = vmatprep.subr.bf16.mxu0 0
        %555 = vmatpush1.bf16.msra.mxu0 0
        %556 = vmatprep.subr.bf16.mxu0 0
        %557 = vmatpush1.bf16.msra.mxu0 0
        %558 = vmatprep.subr.bf16.mxu0 0
        %559 = vmatpush1.bf16.msra.mxu0 %v543
        %560 = vmatprep.subr.bf16.mxu0 0
        %561 = vmatpush1.bf16.msra.mxu0 %v542
        %562 = vmatprep.subr.bf16.mxu0 0
        %563 = vmatpush2.bf16.msra.mxu0 0
        %564 = vmatprep.subr.bf16.mxu0 0
        %565 = vmatpush2.bf16.msra.mxu0 0
        %566 = vmatprep.subr.bf16.mxu0 0
        %567 = vmatpush2.bf16.msra.mxu0 0
        %568 = vmatprep.subr.bf16.mxu0 0
        %569 = vmatpush2.bf16.msra.mxu0 0
        %570 = vmatprep.subr.bf16.mxu0 0
        %571 = vmatpush2.bf16.msra.mxu0 0
        %572 = vmatprep.subr.bf16.mxu0 0
        %573 = vmatpush2.bf16.msra.mxu0 0
        %574 = vmatprep.subr.bf16.mxu0 0
        %575 = vmatpush2.bf16.msra.mxu0 0
        %576 = vmatprep.subr.bf16.mxu0 0
        %577 = vmatpush2.bf16.msra.mxu0 0
        %578 = vmatprep.mubr.bf16.mxu0 0
        %579 = vmatmul.mubr.bf16.gmra.mxu0 %v480
        %v580 = vpop.f32.mrf.mxu0
        %v581 = vadd.f32 %v532, %v580
        %v582 = vpop.f32.mrf.mxu0
        %v583 = vpop.f32.mrf.mxu0
        %v584 = vpop.f32.mrf.mxu0
        %585 = vdwg.mxu0
        %v586 = vld [vmem:[#allocation6] sm:$0xff]
        %v587 = vpack.c.bf16 %v522, %v522
        %v588 = vpack.c.bf16 %v581, %v581
        %vm589 = vcmask 130048
        %v591 = vsel %vm589, %v587, 0
        %v594 = vsel %vm589, %v588, 0
        %596 = vmatprep.subr.bf16.mxu0 0
        %597 = vmatpush1.bf16.xpose.msra.mxu0 0
        %598 = vmatprep.subr.bf16.mxu0 0
        %599 = vmatpush1.bf16.xpose.msra.mxu0 0
        %600 = vmatprep.subr.bf16.mxu0 0
        %601 = vmatpush1.bf16.xpose.msra.mxu0 0
        %602 = vmatprep.subr.bf16.mxu0 0
        %603 = vmatpush1.bf16.xpose.msra.mxu0 0
        %604 = vmatprep.subr.bf16.mxu0 0
        %605 = vmatpush1.bf16.xpose.msra.mxu0 0
        %606 = vmatprep.subr.bf16.mxu0 0
        %607 = vmatpush1.bf16.xpose.msra.mxu0 0
        %608 = vmatprep.subr.bf16.mxu0 0
        %609 = vmatpush1.bf16.xpose.msra.mxu0 0
        %610 = vmatprep.subr.bf16.mxu0 0
        %611 = vmatpush1.bf16.xpose.msra.mxu0 %v594
        %612 = vmatprep.subr.bf16.mxu0 0
        %613 = vmatpush2.bf16.xpose.msra.mxu0 0
        %614 = vmatprep.subr.bf16.mxu0 0
        %615 = vmatpush2.bf16.xpose.msra.mxu0 0
        %616 = vmatprep.subr.bf16.mxu0 0
        %617 = vmatpush2.bf16.xpose.msra.mxu0 0
        %618 = vmatprep.subr.bf16.mxu0 0
        %619 = vmatpush2.bf16.xpose.msra.mxu0 0
        %620 = vmatprep.subr.bf16.mxu0 0
        %621 = vmatpush2.bf16.xpose.msra.mxu0 0
        %622 = vmatprep.subr.bf16.mxu0 0
        %623 = vmatpush2.bf16.xpose.msra.mxu0 0
        %624 = vmatprep.subr.bf16.mxu0 0
        %625 = vmatpush2.bf16.xpose.msra.mxu0 0
        %626 = vmatprep.subr.bf16.mxu0 0
        %627 = vmatpush2.bf16.xpose.msra.mxu0 0
        %628 = vmatprep.mubr.bf16.mxu0 0
        %629 = vmatmul.mubr.bf16.gmra.mxu0 %v591
        %v630 = vpop.f32.mrf.mxu0
        %v631 = vadd.f32 %v586, %v630
        %v632 = vpop.f32.mrf.mxu0
        %v633 = vpop.f32.mrf.mxu0
        %v634 = vpop.f32.mrf.mxu0
        %635 = vdwg.mxu0
        %vm636 = vcmask 64512
        %v637 = vsel %vm636, %v631, -inf
        %638 = vmax.xlane.f32.xlu0 %v637
        %v639 = vpop.xlane.xlu0 %638
        %v640 = vsub.f32 %v631, %v639
        %v641 = vmul.f32 %v640, 1.442695
        %v642 = vpow.pop %v641
        %v643 = vsel %vm636, %v642, 0.0
        %644 = vadd.xlane.f32.xlu0 %v643
        %v645 = vpop.xlane.xlu0 %644
        %v646 = vrcp.pop %v645
        %v647 = vpack.c.bf16 %v642, %v642
        %649 = vrot.lane.b32.xlu0 %v588, 96
        %v650 = vpop.permute.xlu0 %649
        %v652 = vsel %vm636, %v647, 0
        %vm654 = vcmask 1043456
        %v656 = vsel %vm654, %v650, 0
        %658 = vmatprep.subr.bf16.mxu0 0
        %659 = vmatpush1.bf16.msra.mxu0 0
        %660 = vmatprep.subr.bf16.mxu0 0
        %661 = vmatpush1.bf16.msra.mxu0 0
        %662 = vmatprep.subr.bf16.mxu0 0
        %663 = vmatpush1.bf16.msra.mxu0 0
        %664 = vmatprep.subr.bf16.mxu0 0
        %665 = vmatpush1.bf16.msra.mxu0 0
        %666 = vmatprep.subr.bf16.mxu0 0
        %667 = vmatpush1.bf16.msra.mxu0 0
        %668 = vmatprep.subr.bf16.mxu0 0
        %669 = vmatpush1.bf16.msra.mxu0 0
        %670 = vmatprep.subr.bf16.mxu0 0
        %671 = vmatpush1.bf16.msra.mxu0 0
        %672 = vmatprep.subr.bf16.mxu0 0
        %673 = vmatpush1.bf16.msra.mxu0 %v656
        %674 = vmatprep.subr.bf16.mxu0 0
        %675 = vmatpush2.bf16.msra.mxu0 0
        %676 = vmatprep.subr.bf16.mxu0 0
        %677 = vmatpush2.bf16.msra.mxu0 0
        %678 = vmatprep.subr.bf16.mxu0 0
        %679 = vmatpush2.bf16.msra.mxu0 0
        %680 = vmatprep.subr.bf16.mxu0 0
        %681 = vmatpush2.bf16.msra.mxu0 0
        %682 = vmatprep.subr.bf16.mxu0 0
        %683 = vmatpush2.bf16.msra.mxu0 0
        %684 = vmatprep.subr.bf16.mxu0 0
        %685 = vmatpush2.bf16.msra.mxu0 0
        %686 = vmatprep.subr.bf16.mxu0 0
        %687 = vmatpush2.bf16.msra.mxu0 0
        %688 = vmatprep.subr.bf16.mxu0 0
        %689 = vmatpush2.bf16.msra.mxu0 0
        %690 = vmatprep.mubr.bf16.mxu0 0
        %691 = vmatmul.mubr.bf16.gmra.mxu0 %v652
        %v692 = vpop.f32.mrf.mxu0
        %v693 = vadd.f32 0.0, %v692
        %v694 = vpop.f32.mrf.mxu0
        %v695 = vpop.f32.mrf.mxu0
        %v696 = vpop.f32.mrf.mxu0
        %697 = vdwg.mxu0
        %v698 = vmul.f32 %v693, %v646
        %v699 = vpack.c.bf16 %v698, %v698
        %vm700 = vcmask 125952
        %701 = vst.msk [vmem:[#allocation2] sm:$0xf] %vm700, %v699
        %703 = vrot.lane.b32.xlu0 %v587, 112
        %v704 = vpop.permute.xlu0 %703
        %705 = vrot.lane.b32.xlu0 %v588, 112
        %v706 = vpop.permute.xlu0 %705
        %v708 = vsel %vm589, %v704, 0
        %v711 = vsel %vm589, %v706, 0
        %713 = vmatprep.subr.bf16.mxu0 0
        %714 = vmatpush1.bf16.xpose.msra.mxu0 0
        %715 = vmatprep.subr.bf16.mxu0 0
        %716 = vmatpush1.bf16.xpose.msra.mxu0 0
        %717 = vmatprep.subr.bf16.mxu0 0
        %718 = vmatpush1.bf16.xpose.msra.mxu0 0
        %719 = vmatprep.subr.bf16.mxu0 0
        %720 = vmatpush1.bf16.xpose.msra.mxu0 0
        %721 = vmatprep.subr.bf16.mxu0 0
        %722 = vmatpush1.bf16.xpose.msra.mxu0 0
        %723 = vmatprep.subr.bf16.mxu0 0
        %724 = vmatpush1.bf16.xpose.msra.mxu0 0
        %725 = vmatprep.subr.bf16.mxu0 0
        %726 = vmatpush1.bf16.xpose.msra.mxu0 0
        %727 = vmatprep.subr.bf16.mxu0 0
        %728 = vmatpush1.bf16.xpose.msra.mxu0 %v711
        %729 = vmatprep.subr.bf16.mxu0 0
        %730 = vmatpush2.bf16.xpose.msra.mxu0 0
        %731 = vmatprep.subr.bf16.mxu0 0
        %732 = vmatpush2.bf16.xpose.msra.mxu0 0
        %733 = vmatprep.subr.bf16.mxu0 0
        %734 = vmatpush2.bf16.xpose.msra.mxu0 0
        %735 = vmatprep.subr.bf16.mxu0 0
        %736 = vmatpush2.bf16.xpose.msra.mxu0 0
        %737 = vmatprep.subr.bf16.mxu0 0
        %738 = vmatpush2.bf16.xpose.msra.mxu0 0
        %739 = vmatprep.subr.bf16.mxu0 0
        %740 = vmatpush2.bf16.xpose.msra.mxu0 0
        %741 = vmatprep.subr.bf16.mxu0 0
        %742 = vmatpush2.bf16.xpose.msra.mxu0 0
        %743 = vmatprep.subr.bf16.mxu0 0
        %744 = vmatpush2.bf16.xpose.msra.mxu0 0
        %745 = vmatprep.mubr.bf16.mxu0 0
        %746 = vmatmul.mubr.bf16.gmra.mxu0 %v708
        %v747 = vpop.f32.mrf.mxu0
        %v748 = vadd.f32 %v586, %v747
        %v749 = vpop.f32.mrf.mxu0
        %v750 = vpop.f32.mrf.mxu0
        %v751 = vpop.f32.mrf.mxu0
        %752 = vdwg.mxu0
        %v753 = vsel %vm636, %v748, -inf
        %754 = vmax.xlane.f32.xlu0 %v753
        %v755 = vpop.xlane.xlu0 %754
        %v756 = vsub.f32 %v748, %v755
        %v757 = vmul.f32 %v756, 1.442695
        %v758 = vpow.pop %v757
        %v759 = vsel %vm636, %v758, 0.0
        %760 = vadd.xlane.f32.xlu0 %v759
        %v761 = vpop.xlane.xlu0 %760
        %v762 = vrcp.pop %v761
        %v763 = vpack.c.bf16 %v758, %v758
        %764 = vrot.lane.b32.xlu0 %v588, 80
        %v765 = vpop.permute.xlu0 %764
        %v767 = vsel %vm636, %v763, 0
        %v770 = vsel %vm654, %v765, 0
        %772 = vmatprep.subr.bf16.mxu0 0
        %773 = vmatpush1.bf16.msra.mxu0 0
        %774 = vmatprep.subr.bf16.mxu0 0
        %775 = vmatpush1.bf16.msra.mxu0 0
        %776 = vmatprep.subr.bf16.mxu0 0
        %777 = vmatpush1.bf16.msra.mxu0 0
        %778 = vmatprep.subr.bf16.mxu0 0
        %779 = vmatpush1.bf16.msra.mxu0 0
        %780 = vmatprep.subr.bf16.mxu0 0
        %781 = vmatpush1.bf16.msra.mxu0 0
        %782 = vmatprep.subr.bf16.mxu0 0
        %783 = vmatpush1.bf16.msra.mxu0 0
        %784 = vmatprep.subr.bf16.mxu0 0
        %785 = vmatpush1.bf16.msra.mxu0 0
        %786 = vmatprep.subr.bf16.mxu0 0
        %787 = vmatpush1.bf16.msra.mxu0 %v770
        %788 = vmatprep.subr.bf16.mxu0 0
        %789 = vmatpush2.bf16.msra.mxu0 0
        %790 = vmatprep.subr.bf16.mxu0 0
        %791 = vmatpush2.bf16.msra.mxu0 0
        %792 = vmatprep.subr.bf16.mxu0 0
        %793 = vmatpush2.bf16.msra.mxu0 0
        %794 = vmatprep.subr.bf16.mxu0 0
        %795 = vmatpush2.bf16.msra.mxu0 0
        %796 = vmatprep.subr.bf16.mxu0 0
        %797 = vmatpush2.bf16.msra.mxu0 0
        %798 = vmatprep.subr.bf16.mxu0 0
        %799 = vmatpush2.bf16.msra.mxu0 0
        %800 = vmatprep.subr.bf16.mxu0 0
        %801 = vmatpush2.bf16.msra.mxu0 0
        %802 = vmatprep.subr.bf16.mxu0 0
        %803 = vmatpush2.bf16.msra.mxu0 0
        %804 = vmatprep.mubr.bf16.mxu0 0
        %805 = vmatmul.mubr.bf16.gmra.mxu0 %v767
        %v806 = vpop.f32.mrf.mxu0
        %v807 = vadd.f32 0.0, %v806
        %v808 = vpop.f32.mrf.mxu0
        %v809 = vpop.f32.mrf.mxu0
        %v810 = vpop.f32.mrf.mxu0
        %811 = vdwg.mxu0
        %v812 = vmul.f32 %v807, %v762
        %v813 = vpack.c.bf16 %v812, %v812
        %v815 = vunpack.c.l.b16 %v813
        %v816 = vpack.c.b16 %v815, %v815
        %817 = vrot.lane.b32.xlu0 %v816, 16
        %v818 = vpop.permute.xlu0 %817
        %vm820 = vcmask 257152
        %821 = vst.msk [vmem:[#allocation2] sm:$0xf] %vm820, %v818
        %v822 = vld [vmem:[#allocation2] sm:$0xf]
        %v823 = vld [vmem:[#allocation11] sm:$0xf]
        %v824 = vld [vmem:[#allocation11 + $0x4] sm:$0xf]
        %v825 = vld [vmem:[#allocation11 + $0x8] sm:$0xf]
        %v826 = vld [vmem:[#allocation11 + $0xc] sm:$0xf]
        %v827 = vld [vmem:[%s7] sm:$0x1]
        %v829 = vlaneseq
        %v830 = vshrl.u32 %v829, 7
        %v831 = vsub.s32 0, %v830
        %v832 = vrot.slane %v827, %v831
        %v838 = vunpack.c.l.b16 %v823
        %v839 = vunpack.c.l.b16 %v824
        %v840 = vunpack.c.l.b16 %v825
        %v841 = vunpack.c.l.b16 %v826
        %v842 = vpack.c.b16 %v839, %v838
        %v843 = vpack.c.b16 %v841, %v840
        %v847 = vsel %vm478, %v822, 0
        %849 = vmatprep.subr.bf16.mxu0 0
        %850 = vmatpush1.bf16.msra.mxu0 0
        %851 = vmatprep.subr.bf16.mxu0 0
        %852 = vmatpush1.bf16.msra.mxu0 0
        %853 = vmatprep.subr.bf16.mxu0 0
        %854 = vmatpush1.bf16.msra.mxu0 0
        %855 = vmatprep.subr.bf16.mxu0 0
        %856 = vmatpush1.bf16.msra.mxu0 0
        %857 = vmatprep.subr.bf16.mxu0 0
        %858 = vmatpush1.bf16.msra.mxu0 0
        %859 = vmatprep.subr.bf16.mxu0 0
        %860 = vmatpush1.bf16.msra.mxu0 0
        %861 = vmatprep.subr.bf16.mxu0 0
        %862 = vmatpush1.bf16.msra.mxu0 %v843
        %863 = vmatprep.subr.bf16.mxu0 0
        %864 = vmatpush1.bf16.msra.mxu0 %v842
        %865 = vmatprep.subr.bf16.mxu0 0
        %866 = vmatpush2.bf16.msra.mxu0 0
        %867 = vmatprep.subr.bf16.mxu0 0
        %868 = vmatpush2.bf16.msra.mxu0 0
        %869 = vmatprep.subr.bf16.mxu0 0
        %870 = vmatpush2.bf16.msra.mxu0 0
        %871 = vmatprep.subr.bf16.mxu0 0
        %872 = vmatpush2.bf16.msra.mxu0 0
        %873 = vmatprep.subr.bf16.mxu0 0
        %874 = vmatpush2.bf16.msra.mxu0 0
        %875 = vmatprep.subr.bf16.mxu0 0
        %876 = vmatpush2.bf16.msra.mxu0 0
        %877 = vmatprep.subr.bf16.mxu0 0
        %878 = vmatpush2.bf16.msra.mxu0 0
        %879 = vmatprep.subr.bf16.mxu0 0
        %880 = vmatpush2.bf16.msra.mxu0 0
        %881 = vmatprep.mubr.bf16.mxu0 0
        %882 = vmatmul.mubr.bf16.gmra.mxu0 %v847
        %v883 = vpop.f32.mrf.mxu0
        %v884 = vadd.f32 %v832, %v883
        %v885 = vpop.f32.mrf.mxu0
        %v886 = vpop.f32.mrf.mxu0
        %v887 = vpop.f32.mrf.mxu0
        %888 = vdwg.mxu0
        %v889 = vadd.f32 %v884, %v453
        %v890 = vsel %vm478, %v889, 0.0
        %891 = vadd.xlane.f32.xlu0 %v890
        %v892 = vpop.xlane.xlu0 %891
        %v893 = vrcp.pop 32.0
        %v894 = vmul.f32 %v892, %v893
        %v895 = vsub.f32 %v889, %v894
        %v896 = vmul.f32 %v895, %v895
        %v897 = vsel %vm478, %v896, 0.0
        %898 = vadd.xlane.f32.xlu0 %v897
        %v899 = vpop.xlane.xlu0 %898
        %v900 = vmul.f32 %v899, %v893
        %v901 = vadd.f32 %v900, 1e-12
        %v902 = vrsqrt.pop %v901
        %v903 = vld [vmem:[%s8] sm:$0x1]
        %v904 = vmul.f32 %v895, %v902
        %v906 = vlaneseq
        %v907 = vshrl.u32 %v906, 7
        %v908 = vsub.s32 0, %v907
        %v909 = vrot.slane %v903, %v908
        %v911 = vmul.f32 %v909, %v904
        %v912 = vld [vmem:[%s9] sm:$0x1]
        %v914 = vlaneseq
        %v915 = vshrl.u32 %v914, 7
        %v916 = vsub.s32 0, %v915
        %v917 = vrot.slane %v912, %v916
        %v919 = vadd.f32 %v911, %v917
        %920 = vst.msk [vmem:[%s451] sm:$0xff] %vm478, %v919
        %s921 = sand.u32 %s271, 1
        %s922 = scalar_lea.sflag [#allocation5], %s921
        %s923 = sand.u32 %s271, 1
        %s924 = smul.addr %s923, 8
        %s925 = scalar_lea.vmem [#allocation12], %s924
        // Predicated region
        $region81: #{tpu_custom_call.1} parent=59 // pred_check
          %p926 = pneg %p281
        $region82: #{tpu_custom_call.1} parent=59 // pred_check_branch
          %928 = sbr.rel (%p926) target = $region84
        $region83: #{tpu_custom_call.1} parent=59 // pred_region
          %s930 = ssub.s32 128, 128
          %931 = vsyncadd %s922, %s930
          %s932 = sadd.s32 %s34, %s33
          %s933 = smul.addr %s932, 128
          %s934 = scalar_lea.hbm %s10, %s933
          %s936 = sshll.u32 %s925, 4
          %s937 = int_to_ptr.vmem [resolvable:$true] %s936
          %939 = dma.vmem_to_hbm [thread:$0]  %s937, 128, %s934, %s922
        $region84: #{tpu_custom_call.1} parent=59 // pred_fallthru
          _
      $region60: #{tpu_custom_call.1} parent=5 // pred_fallthru
        _
      %p940 = scmp.le.s32.totalorder 2, %s24
      // Predicated region
      $region85: #{tpu_custom_call.1} parent=5 // pred_check
        %p941 = pneg %p940
      $region86: #{tpu_custom_call.1} parent=5 // pred_check_branch
        %943 = sbr.rel (%p941) target = $region88
      $region87: #{tpu_custom_call.1} parent=5 // pred_region
        %s944 = ssub.s32 %s24, 2
        // Predicated region
        $region89: #{tpu_custom_call.1} parent=87 // pred_check
          %p945 = pneg %p287
        $region90: #{tpu_custom_call.1} parent=87 // pred_check_branch
          %947 = sbr.rel (%p945) target = $region92
        $region91: #{tpu_custom_call.1} parent=87 // pred_region
          %s948 = sand.u32 %s272, 1
          %s949 = scalar_lea.sflag [#allocation5], %s948
          %s950 = sand.u32 %s272, 1
          %s951 = smul.addr %s950, 8
          %s952 = scalar_lea.vmem [#allocation12], %s951
          %953 = dma.done %s949, 128
        $region92: #{tpu_custom_call.1} parent=87 // pred_fallthru
          _
      $region88: #{tpu_custom_call.1} parent=5 // pred_fallthru
        _
    $region6: #{tpu_custom_call.1} parent=1 // loop_footer
      %s28 = sadd.s32 1, %s24
    $region7: #{tpu_custom_call.1} parent=1 // loop_footer_branch
      %23 = sbr.rel target = $region3
    $region8: #{tpu_custom_call.1} parent=1 // loop_exit
      _
    %954 = vsyncpa [#allocation4], 1
    %s955 = scalar_lea.sflag [#allocation4], 1
    %956 = vsyncpa %s955, 1
    %957 = vsyncpa [#allocation7], 1
    %958 = vsyncpa [#allocation10], 1
    %959 = vsyncpa [#allocation5], 1
    %s960 = scalar_lea.sflag [#allocation5], 1
    %961 = vsyncpa %s960, 1

</llo_original>
